<compile_context>
chip_gen: v6e
topology: v6e:2x2x1
jax: 0.10.0
libtpu: 0.0.40
codegen_flags: <defaults>
</compile_context>

<pallas_src>
import jax
import jax.numpy as jnp
from jax.experimental import pallas as pl
from jax.experimental.pallas import tpu as pltpu

IN_FEATURES = 13
WIDTH = 32
TM_TARGET = 4096  # rows per grid step (multiple of 128); sweep 4096-16384


def ffn_kernel(x_ref, w_in_ref, b_in_ref, w_h_ref, b_h_ref,
               w_out_ref, b_out_ref, o_ref):
    # Feature-major layout: activations live as (WIDTH, tm) so the 32-wide
    # feature axis sits on sublanes and the batch axis is lane-dense.

    # Transpose the (tm, 13) input tile on the XLU (slack unit), then cast the
    # small (13, tm) result to bf16 (far fewer cast vregs than casting pre-T).
    xt = x_ref[...].T.astype(jnp.bfloat16)                       # (13, tm)

    # layer 'input': h = relu(W1 @ x^T + b1) -> (32, tm); bf16 MXU, f32 acc.
    h = jnp.dot(w_in_ref[...], xt, preferred_element_type=jnp.float32)
    h = jnp.maximum(h + b_in_ref[...], 0.0)

    # layer 'hidden0': relu(W2 @ h + b2). BatchNorm (toggle off) and dropout
    # (p=0.0) are exact no-ops for this config and elided.
    h = jnp.dot(w_h_ref[...], h.astype(jnp.bfloat16),
                preferred_element_type=jnp.float32)
    h = jnp.maximum(h + b_h_ref[...], 0.0)

    # layer 'output': Linear(32, 1) as an f32 VPU multiply + sublane (XLU)
    # reduction; result lands lane-dense as (1, tm).
    out = jnp.sum(h * w_out_ref[...], axis=0, keepdims=True)     # (1, tm)
    o_ref[...] = (out + b_out_ref[0, 0]).astype(o_ref.dtype)


def _pick_tile(n):
    # Tiny batches: full-dim blocks are always legal (single grid step).
    if n <= 128:
        return n
    # Otherwise tm must be a multiple of 128 (it is the lane dim of the
    # (1, tm) output block and the sublane dim of the x block). Aim for >= 2
    # grid steps so the "parallel" axis spreads across both v7x TensorCores,
    # capped at TM_TARGET.
    half = -(-n // 2)
    tm = -(-half // 128) * 128
    return min(TM_TARGET, tm)


def ffn_heart_disease(x, params):
    """x: [N, 13] float32. params: dict of weights/biases. Returns [N, 1] f32."""
    n = x.shape[0]
    tm = _pick_tile(n)
    grid = (pl.cdiv(n, tm),)

    weight_bytes = (2 * (IN_FEATURES * WIDTH + WIDTH * WIDTH)   # bf16 matmul weights
                    + 4 * (WIDTH + WIDTH + WIDTH + 1))          # f32 biases + w_out
    cost = pl.CostEstimate(
        flops=2 * n * (IN_FEATURES * WIDTH + WIDTH * WIDTH + WIDTH),
        transcendentals=0,
        bytes_accessed=n * (IN_FEATURES + 1) * 4 + weight_bytes,
    )

    const = lambda i: (0, 0)
    out = pl.pallas_call(
        ffn_kernel,
        out_shape=jax.ShapeDtypeStruct((1, n), jnp.float32),
        grid=grid,
        in_specs=[
            # x tile; default double-buffering is enough (per-step DMA <1 MiB).
            # TODO(synk): bump to pipeline_mode=pl.Buffered(3) only if profiling
            # shows the x DMA exposed on the critical path.
            pl.BlockSpec((tm, IN_FEATURES), lambda i: (i, 0)),
            pl.BlockSpec((WIDTH, IN_FEATURES), const),              # w_in (bf16)
            pl.BlockSpec((WIDTH, 1), const),                        # b_in (f32)
            pl.BlockSpec((WIDTH, WIDTH), const),                    # w_h  (bf16)
            pl.BlockSpec((WIDTH, 1), const),                        # b_h  (f32)
            pl.BlockSpec((WIDTH, 1), const),                        # w_out column (f32)
            pl.BlockSpec((1, 1), const, memory_space=pltpu.SMEM),   # b_out scalar
        ],
        out_specs=pl.BlockSpec((1, tm), lambda i: (0, i)),          # lane-dense row
        compiler_params=pltpu.CompilerParams(
            dimension_semantics=("parallel",),      # megacore sharding on v7x
            vmem_limit_bytes=32 * 1024 * 1024,      # headroom over v5e's 16 MiB default
        ),
        cost_estimate=cost,
    )(x,
      params["w_in"], params["b_in"],
      params["w_h"], params["b_h"],
      params["w_out"], params["b_out"])

    # (1, N) row-major -> (N, 1); pure layout change in the wrapper.
    return out.reshape(n, 1)


def init_params(key, width=WIDTH, in_features=IN_FEATURES):
    ks = jax.random.split(key, 6)
    s_in = 1.0 / jnp.sqrt(in_features)
    s_h = 1.0 / jnp.sqrt(width)
    u = lambda k, shape, s: jax.random.uniform(k, shape, jnp.float32, -s, s)
    return {
        # MXU weights pre-cast to bf16; biases / output weight stay f32
        # (elementwise math stays f32, required on v5e's non-bf16 VPU).
        "w_in": u(ks[0], (width, in_features), s_in).astype(jnp.bfloat16),
        "b_in": u(ks[1], (width, 1), s_in),
        "w_h": u(ks[2], (width, width), s_h).astype(jnp.bfloat16),
        "b_h": u(ks[3], (width, 1), s_h),
        "w_out": u(ks[4], (width, 1), s_h),   # PyTorch (1, width) stored transposed
        "b_out": u(ks[5], (1, 1), s_h),
    }


def reference_forward_bf16(x, p):
    """Matches the kernel's bf16-MXU / f32-accumulate numerics."""
    h = jnp.dot(x.astype(jnp.bfloat16), p["w_in"].T,
                preferred_element_type=jnp.float32) + p["b_in"].T
    h = jnp.maximum(h, 0.0)
    h = jnp.dot(h.astype(jnp.bfloat16), p["w_h"].T,
                preferred_element_type=jnp.float32) + p["b_h"].T
    h = jnp.maximum(h, 0.0)
    return h @ p["w_out"] + p["b_out"][0, 0]


def reference_forward_f32(x, p):
    """Pure-f32 module semantics (PyTorch reference)."""
    h = jnp.maximum(x @ p["w_in"].astype(jnp.float32).T + p["b_in"].T, 0.0)
    h = jnp.maximum(h @ p["w_h"].astype(jnp.float32).T + p["b_h"].T, 0.0)
    return h @ p["w_out"] + p["b_out"][0, 0]


if __name__ == "__main__":
    key = jax.random.PRNGKey(0)
    k_x, k_p = jax.random.split(key)

    batch = 64  # small demo shape; kernel scales to arbitrary N via the grid
    x = jax.random.normal(k_x, (batch, IN_FEATURES), dtype=jnp.float32)
    params = init_params(k_p)

    out = ffn_heart_disease(x, params)
    jax.block_until_ready(out)

    assert out.shape == (batch, 1)

    ref_bf16 = reference_forward_bf16(x, params)
    assert jnp.allclose(out, ref_bf16, atol=2e-3, rtol=2e-3), (
        "mismatch vs bf16-matched reference")

    # Loose check against the pure-f32 PyTorch semantics (bf16 MXU rounding).
    ref_f32 = reference_forward_f32(x, params)
    assert jnp.allclose(out, ref_f32, atol=5e-2, rtol=5e-2), (
        "mismatch vs f32 reference")

    print("KERNEL_OK")
</pallas_src>

<mosaic_0001>
module attributes {stable_mosaic.version = 11 : i64} {
  func.func @ffn_kernel(%arg0: i32, %arg1: memref<64x13xf32, #tpu.memory_space<vmem>>, %arg2: memref<32x13xbf16, #tpu.memory_space<vmem>>, %arg3: memref<32x1xf32, #tpu.memory_space<vmem>>, %arg4: memref<32x32xbf16, #tpu.memory_space<vmem>>, %arg5: memref<32x1xf32, #tpu.memory_space<vmem>>, %arg6: memref<32x1xf32, #tpu.memory_space<vmem>>, %arg7: memref<1x1xf32, #tpu.memory_space<smem>>, %arg8: memref<1x64xf32, #tpu.memory_space<vmem>>) attributes {dimension_semantics = [#tpu.dimension_semantics<parallel>], iteration_bounds = array<i64: 1>, scalar_prefetch = 0 : i64, scratch_operands = 0 : i64, tpu.core_type = #tpu.core_type<tc>, window_params = [{transform_indices = @transform_0, window_bounds = array<i64: 64, 13>}, {pipeline_mode = #tpu.pipeline_mode<synchronous>, transform_indices = @transform_1, window_bounds = array<i64: 32, 13>}, {pipeline_mode = #tpu.pipeline_mode<synchronous>, transform_indices = @transform_2, window_bounds = array<i64: 32, 1>}, {pipeline_mode = #tpu.pipeline_mode<synchronous>, transform_indices = @transform_3, window_bounds = array<i64: 32, 32>}, {pipeline_mode = #tpu.pipeline_mode<synchronous>, transform_indices = @transform_4, window_bounds = array<i64: 32, 1>}, {pipeline_mode = #tpu.pipeline_mode<synchronous>, transform_indices = @transform_5, window_bounds = array<i64: 32, 1>}, {transform_indices = @transform_6, window_bounds = array<i64: 1, 1>}, {transform_indices = @transform_7, window_bounds = array<i64: 1, 64>}]} {
    %c0 = arith.constant 0 : index
    %c0_0 = arith.constant 0 : index
    %0 = vector.load %arg1[%c0, %c0_0] : memref<64x13xf32, #tpu.memory_space<vmem>>, vector<64x13xf32>
    %1 = tpu.transpose %0, [1, 0] : vector<64x13xf32> -> vector<13x64xf32>
    %2 = arith.truncf %1 : vector<13x64xf32> to vector<13x64xbf16>
    %c0_1 = arith.constant 0 : index
    %c0_2 = arith.constant 0 : index
    %3 = vector.load %arg2[%c0_1, %c0_2] : memref<32x13xbf16, #tpu.memory_space<vmem>>, vector<32x13xbf16>
    %cst = arith.constant dense<0.000000e+00> : vector<32x64xf32>
    %4 = tpu.matmul %3, %2, %cst {dimension_numbers = #tpu.dot_dimension_numbers<[1], [0], [0], [1], [0, 0, 1, 1], [], []>} : vector<32x13xbf16>, vector<13x64xbf16>, vector<32x64xf32> -> vector<32x64xf32>
    %c0_3 = arith.constant 0 : index
    %c0_4 = arith.constant 0 : index
    %5 = vector.load %arg3[%c0_3, %c0_4] : memref<32x1xf32, #tpu.memory_space<vmem>>, vector<32x1xf32>
    %6 = vector.broadcast %5 : vector<32x1xf32> to vector<32x64xf32>
    %7 = arith.addf %4, %6 : vector<32x64xf32>
    %cst_5 = arith.constant 0.000000e+00 : f32
    %8 = vector.broadcast %cst_5 : f32 to vector<32x64xf32>
    %9 = arith.maximumf %7, %8 : vector<32x64xf32>
    %c0_6 = arith.constant 0 : index
    %c0_7 = arith.constant 0 : index
    %10 = vector.load %arg4[%c0_6, %c0_7] : memref<32x32xbf16, #tpu.memory_space<vmem>>, vector<32x32xbf16>
    %11 = arith.truncf %9 : vector<32x64xf32> to vector<32x64xbf16>
    %cst_8 = arith.constant dense<0.000000e+00> : vector<32x64xf32>
    %12 = tpu.matmul %10, %11, %cst_8 {dimension_numbers = #tpu.dot_dimension_numbers<[1], [0], [0], [1], [0, 0, 1, 1], [], []>} : vector<32x32xbf16>, vector<32x64xbf16>, vector<32x64xf32> -> vector<32x64xf32>
    %c0_9 = arith.constant 0 : index
    %c0_10 = arith.constant 0 : index
    %13 = vector.load %arg5[%c0_9, %c0_10] : memref<32x1xf32, #tpu.memory_space<vmem>>, vector<32x1xf32>
    %14 = vector.broadcast %13 : vector<32x1xf32> to vector<32x64xf32>
    %15 = arith.addf %12, %14 : vector<32x64xf32>
    %cst_11 = arith.constant 0.000000e+00 : f32
    %16 = vector.broadcast %cst_11 : f32 to vector<32x64xf32>
    %17 = arith.maximumf %15, %16 : vector<32x64xf32>
    %c0_12 = arith.constant 0 : index
    %c0_13 = arith.constant 0 : index
    %18 = vector.load %arg6[%c0_12, %c0_13] : memref<32x1xf32, #tpu.memory_space<vmem>>, vector<32x1xf32>
    %19 = vector.broadcast %18 : vector<32x1xf32> to vector<32x64xf32>
    %20 = arith.mulf %17, %19 : vector<32x64xf32>
    %cst_14 = arith.constant dense<0.000000e+00> : vector<64xf32>
    %21 = vector.multi_reduction <add>, %20, %cst_14 [0] : vector<32x64xf32> to vector<64xf32>
    %22 = vector.shape_cast %21 : vector<64xf32> to vector<1x64xf32>
    %c0_15 = arith.constant 0 : index
    %c0_16 = arith.constant 0 : index
    %23 = memref.load %arg7[%c0_15, %c0_16] : memref<1x1xf32, #tpu.memory_space<smem>>
    %24 = vector.broadcast %23 : f32 to vector<1x64xf32>
    %25 = arith.addf %22, %24 : vector<1x64xf32>
    %c0_17 = arith.constant 0 : index
    %c0_18 = arith.constant 0 : index
    %26 = vector.load %arg8[%c0_17, %c0_18] : memref<1x64xf32, #tpu.memory_space<vmem>>, vector<1x64xf32>
    tpu.vector_store %arg8[%c0_17, %c0_18], %25 {strides = array<i32>} : memref<1x64xf32, #tpu.memory_space<vmem>>, vector<1x64xf32>,
    return
  }
  func.func @transform_0(%arg0: i32) -> (i32, i32) {
    %c0_i32 = arith.constant 0 : i32
    %c0_i32_0 = arith.constant 0 : i32
    return %arg0, %c0_i32 : i32, i32
  }
  func.func @transform_1(%arg0: i32) -> (i32, i32) {
    %c0_i32 = arith.constant 0 : i32
    %c0_i32_0 = arith.constant 0 : i32
    %c0_i32_1 = arith.constant 0 : i32
    return %c0_i32, %c0_i32_0 : i32, i32
  }
  func.func @transform_2(%arg0: i32) -> (i32, i32) {
    %c0_i32 = arith.constant 0 : i32
    %c0_i32_0 = arith.constant 0 : i32
    %c0_i32_1 = arith.constant 0 : i32
    return %c0_i32, %c0_i32_0 : i32, i32
  }
  func.func @transform_3(%arg0: i32) -> (i32, i32) {
    %c0_i32 = arith.constant 0 : i32
    %c0_i32_0 = arith.constant 0 : i32
    %c0_i32_1 = arith.constant 0 : i32
    return %c0_i32, %c0_i32_0 : i32, i32
  }
  func.func @transform_4(%arg0: i32) -> (i32, i32) {
    %c0_i32 = arith.constant 0 : i32
    %c0_i32_0 = arith.constant 0 : i32
    %c0_i32_1 = arith.constant 0 : i32
    return %c0_i32, %c0_i32_0 : i32, i32
  }
  func.func @transform_5(%arg0: i32) -> (i32, i32) {
    %c0_i32 = arith.constant 0 : i32
    %c0_i32_0 = arith.constant 0 : i32
    %c0_i32_1 = arith.constant 0 : i32
    return %c0_i32, %c0_i32_0 : i32, i32
  }
  func.func @transform_6(%arg0: i32) -> (i32, i32) {
    %c0_i32 = arith.constant 0 : i32
    %c0_i32_0 = arith.constant 0 : i32
    %c0_i32_1 = arith.constant 0 : i32
    return %c0_i32, %c0_i32_0 : i32, i32
  }
  func.func @transform_7(%arg0: i32) -> (i32, i32) {
    %c0_i32 = arith.constant 0 : i32
    %c0_i32_0 = arith.constant 0 : i32
    return %c0_i32, %arg0 : i32, i32
  }
}

</mosaic_0001>

<llo_original>
// kernel: tpu_custom_call.1
$region0: #{tpu_custom_call.1}
  #allocation0 [shape = 'u32[]', space=smem, size = 0x4, offset = 0x4, fixed_abs, tag = 'smem constant byte address 0x4 - core index']
  #allocation1 [shape = 'u32[144,128]{1,0:T(1,128)}', space=vmem, size = 0x12000, scoped, tag = 'internal scratch']
  #allocation2 [shape = 'f32[1,1]{1,0:T(1,128)S(6)}', space=smem, size = 0x200, scoped, tag = 'scoped memory for tpu_custom_call.1']
  %s0 = inlined_call_operand.vmem [shape: f32[64,13], index: 0, kind: input, shape index: {}]
  %s1 = inlined_call_operand.vmem [shape: bf16[32,13], index: 1, kind: input, shape index: {}]
  %s2 = inlined_call_operand.vmem [shape: f32[32,1], index: 2, kind: input, shape index: {}]
  %s3 = inlined_call_operand.vmem [shape: bf16[32,32], index: 3, kind: input, shape index: {}]
  %s4 = inlined_call_operand.vmem [shape: f32[32,1], index: 4, kind: input, shape index: {}]
  %s5 = inlined_call_operand.vmem [shape: f32[32,1], index: 5, kind: input, shape index: {}]
  %s6 = inlined_call_operand.<no memory space> [shape: f32[1,1], index: 6, kind: input, shape index: {}]
  %s7 = inlined_call_operand.hbm [shape: f32[1,64], index: 7, kind: output, shape index: {}]
  %s8 = sld [smem:[#allocation0]]
  $region38: #{tpu_custom_call.1} parent=0
    _
  %s10 = ssub.s32 1, %s8
  %s11 = scalar_select 0, %s10, %s8
  %12 = sst [smem:[#allocation2]] %s6
  $region1: #{tpu_custom_call.1} parent=0
    #allocation3 [shape = 'u8[512]{0}', space=vmem, size = 0x400, scoped, tag = 'output window, operand 0, single buffered']
    #allocation4 [shape = 's32[1]{0}', space=sflag, size = 0x4, scoped, tag = 'scoped memory for tpu_custom_call.1']
    %13 = vsyncpa [#allocation4], 0
    // Predicated region
    $region2: #{tpu_custom_call.1} parent=1 // pred_check
      _
    $region3: #{tpu_custom_call.1} parent=1 // pred_check_branch
      %15 = sbr.rel (0) target = $region5
    $region4: #{tpu_custom_call.1} parent=1 // pred_region
      _
    $region5: #{tpu_custom_call.1} parent=1 // pred_fallthru
      _
    // Predicated region
    $region6: #{tpu_custom_call.1} parent=1 // pred_check
      _
    $region7: #{tpu_custom_call.1} parent=1 // pred_check_branch
      %17 = sbr.rel (0) target = $region9
    $region8: #{tpu_custom_call.1} parent=1 // pred_region
      _
    $region9: #{tpu_custom_call.1} parent=1 // pred_fallthru
      _
    // Predicated region
    $region10: #{tpu_custom_call.1} parent=1 // pred_check
      _
    $region11: #{tpu_custom_call.1} parent=1 // pred_check_branch
      %19 = sbr.rel (0) target = $region13
    $region12: #{tpu_custom_call.1} parent=1 // pred_region
      _
    $region13: #{tpu_custom_call.1} parent=1 // pred_fallthru
      _
    // Predicated region
    $region14: #{tpu_custom_call.1} parent=1 // pred_check
      _
    $region15: #{tpu_custom_call.1} parent=1 // pred_check_branch
      %21 = sbr.rel (0) target = $region17
    $region16: #{tpu_custom_call.1} parent=1 // pred_region
      _
    $region17: #{tpu_custom_call.1} parent=1 // pred_fallthru
      _
    // Predicated region
    $region18: #{tpu_custom_call.1} parent=1 // pred_check
      _
    $region19: #{tpu_custom_call.1} parent=1 // pred_check_branch
      %23 = sbr.rel (0) target = $region21
    $region20: #{tpu_custom_call.1} parent=1 // pred_region
      _
    $region21: #{tpu_custom_call.1} parent=1 // pred_fallthru
      _
    // Predicated region
    $region22: #{tpu_custom_call.1} parent=1 // pred_check
      _
    $region23: #{tpu_custom_call.1} parent=1 // pred_check_branch
      %25 = sbr.rel (0) target = $region25
    $region24: #{tpu_custom_call.1} parent=1 // pred_region
      _
    $region25: #{tpu_custom_call.1} parent=1 // pred_fallthru
      _
    // Predicated region
    $region26: #{tpu_custom_call.1} parent=1 // pred_check
      _
    $region27: #{tpu_custom_call.1} parent=1 // pred_check_branch
      %27 = sbr.rel (0) target = $region29
    $region28: #{tpu_custom_call.1} parent=1 // pred_region
      _
    $region29: #{tpu_custom_call.1} parent=1 // pred_fallthru
      _
    %v29 = vld [vmem:[%s0] sm:$0xff]
    %v30 = vld [vmem:[%s0 + $0x8] sm:$0xff]
    %v31 = vld [vmem:[%s0 + $0x10] sm:$0xff]
    %v32 = vld [vmem:[%s0 + $0x18] sm:$0xff]
    %v33 = vld [vmem:[%s0 + $0x20] sm:$0xff]
    %v34 = vld [vmem:[%s0 + $0x28] sm:$0xff]
    %v35 = vld [vmem:[%s0 + $0x30] sm:$0xff]
    %v36 = vld [vmem:[%s0 + $0x38] sm:$0xff]
    %37 = vxpose.xlu0.b32.start [1/16] %v29, 128
    %38 = vxpose.xlu0.b32.cont [2/16] %v30, 128
    %39 = vxpose.xlu0.b32.cont [3/16] %v31, 128
    %40 = vxpose.xlu0.b32.cont [4/16] %v32, 128
    %41 = vxpose.xlu0.b32.cont [5/16] %v33, 128
    %42 = vxpose.xlu0.b32.cont [6/16] %v34, 128
    %43 = vxpose.xlu0.b32.cont [7/16] %v35, 128
    %44 = vxpose.xlu0.b32.cont [8/16] %v36, 128
    %45 = vxpose.xlu0.b32.cont [9/16] 0.0, 128
    %46 = vxpose.xlu0.b32.cont [10/16] 0.0, 128
    %47 = vxpose.xlu0.b32.cont [11/16] 0.0, 128
    %48 = vxpose.xlu0.b32.cont [12/16] 0.0, 128
    %49 = vxpose.xlu0.b32.cont [13/16] 0.0, 128
    %50 = vxpose.xlu0.b32.cont [14/16] 0.0, 128
    %51 = vxpose.xlu0.b32.cont [15/16] 0.0, 128
    %52 = vxpose.xlu0.b32.end [16/16] 0.0, 128
    %v53 = vpop.trf.xlu0
    %v54 = vpop.trf.xlu0
    %v55 = vpop.trf.xlu0
    %v56 = vpop.trf.xlu0
    %v57 = vpop.trf.xlu0
    %v58 = vpop.trf.xlu0
    %v59 = vpop.trf.xlu0
    %v60 = vpop.trf.xlu0
    %v61 = vpop.trf.xlu0
    %v62 = vpop.trf.xlu0
    %v63 = vpop.trf.xlu0
    %v64 = vpop.trf.xlu0
    %v65 = vpop.trf.xlu0
    %v66 = vpop.trf.xlu0
    %v67 = vpop.trf.xlu0
    %v68 = vpop.trf.xlu0
    %v69 = vpack.c.bf16 %v54, %v53
    %v70 = vld [vmem:[%s1] sm:$0xf]
    %v71 = vld [vmem:[%s1 + $0x4] sm:$0xf]
    %v72 = vld [vmem:[%s1 + $0x8] sm:$0xf]
    %v73 = vld [vmem:[%s1 + $0xc] sm:$0xf]
    %v74 = vld [vmem:[%s2] sm:$0xff]
    %v75 = vld [vmem:[%s2 + $0x8] sm:$0xff]
    %v76 = vld [vmem:[%s2 + $0x10] sm:$0xff]
    %v77 = vld [vmem:[%s2 + $0x18] sm:$0xff]
    %79 = vset.pattern.permute.xlu0 0
    %80 = vperm.xlu0 %79, %v74
    %v81 = vpop.permute.xlu0 %80
    %84 = vset.pattern.permute.xlu0 0
    %85 = vperm.xlu0 %84, %v75
    %v86 = vpop.permute.xlu0 %85
    %89 = vset.pattern.permute.xlu0 0
    %90 = vperm.xlu0 %89, %v76
    %v91 = vpop.permute.xlu0 %90
    %94 = vset.pattern.permute.xlu0 0
    %95 = vperm.xlu0 %94, %v77
    %v96 = vpop.permute.xlu0 %95
    %v102 = vunpack.c.l.b16 %v70
    %v103 = vunpack.c.l.b16 %v71
    %v104 = vunpack.c.l.b16 %v72
    %v105 = vunpack.c.l.b16 %v73
    %v106 = vpack.c.b16 %v103, %v102
    %v107 = vpack.c.b16 %v105, %v104
    %vm108 = vcmask 105472
    %v110 = vsel %vm108, %v106, 0
    %v113 = vsel %vm108, %v107, 0
    %vm115 = vcmask 1045504
    %vm116 = vcmask 1046528
    %v117 = vsel %vm115, 4294967295, 65535
    %v118 = vsel %vm116, %v117, 0
    %v120 = vand.u32 %v69, %v118
    %122 = vmatprep.subr.bf16.mxu0 0
    %123 = vmatpush1.bf16.msra.mxu0 0
    %124 = vmatprep.subr.bf16.mxu0 0
    %125 = vmatpush1.bf16.msra.mxu0 0
    %126 = vmatprep.subr.bf16.mxu0 0
    %127 = vmatpush1.bf16.msra.mxu0 0
    %128 = vmatprep.subr.bf16.mxu0 0
    %129 = vmatpush1.bf16.msra.mxu0 0
    %130 = vmatprep.subr.bf16.mxu0 0
    %131 = vmatpush1.bf16.msra.mxu0 0
    %132 = vmatprep.subr.bf16.mxu0 0
    %133 = vmatpush1.bf16.msra.mxu0 0
    %134 = vmatprep.subr.bf16.mxu0 0
    %135 = vmatpush1.bf16.msra.mxu0 0
    %136 = vmatprep.subr.bf16.mxu0 0
    %137 = vmatpush1.bf16.msra.mxu0 %v120
    %138 = vmatprep.subr.bf16.mxu0 0
    %139 = vmatpush2.bf16.msra.mxu0 0
    %140 = vmatprep.subr.bf16.mxu0 0
    %141 = vmatpush2.bf16.msra.mxu0 0
    %142 = vmatprep.subr.bf16.mxu0 0
    %143 = vmatpush2.bf16.msra.mxu0 0
    %144 = vmatprep.subr.bf16.mxu0 0
    %145 = vmatpush2.bf16.msra.mxu0 0
    %146 = vmatprep.subr.bf16.mxu0 0
    %147 = vmatpush2.bf16.msra.mxu0 0
    %148 = vmatprep.subr.bf16.mxu0 0
    %149 = vmatpush2.bf16.msra.mxu0 0
    %150 = vmatprep.subr.bf16.mxu0 0
    %151 = vmatpush2.bf16.msra.mxu0 0
    %152 = vmatprep.subr.bf16.mxu0 0
    %153 = vmatpush2.bf16.msra.mxu0 0
    %154 = vmatprep.mubr.bf16.mxu0 0
    %155 = vmatmul.mubr.bf16.gmra.mxu0 %v110
    %v156 = vpop.f32.mrf.mxu0
    %v157 = vadd.f32 %v81, %v156
    %v158 = vpop.f32.mrf.mxu0
    %v159 = vpop.f32.mrf.mxu0
    %v160 = vadd.f32 %v86, %v159
    %v161 = vpop.f32.mrf.mxu0
    %162 = vmatprep.mubr.bf16.mxu0 0
    %163 = vmatmul.mubr.bf16.gmra.mxu0 %v113
    %v164 = vpop.f32.mrf.mxu0
    %v165 = vadd.f32 %v91, %v164
    %v166 = vpop.f32.mrf.mxu0
    %v167 = vpop.f32.mrf.mxu0
    %v168 = vadd.f32 %v96, %v167
    %v169 = vpop.f32.mrf.mxu0
    %170 = vdwg.mxu0
    %v171 = vmax.f32 %v157, 0.0
    %v172 = vmax.f32 %v160, 0.0
    %v173 = vmax.f32 %v165, 0.0
    %v174 = vmax.f32 %v168, 0.0
    %v175 = vld [vmem:[%s3] sm:$0xf]
    %v176 = vld [vmem:[%s3 + $0x4] sm:$0xf]
    %v177 = vld [vmem:[%s3 + $0x8] sm:$0xf]
    %v178 = vld [vmem:[%s3 + $0xc] sm:$0xf]
    %v179 = vpack.c.bf16 %v172, %v171
    %v180 = vpack.c.bf16 %v174, %v173
    %v181 = vld [vmem:[%s4] sm:$0xff]
    %v182 = vld [vmem:[%s4 + $0x8] sm:$0xff]
    %v183 = vld [vmem:[%s4 + $0x10] sm:$0xff]
    %v184 = vld [vmem:[%s4 + $0x18] sm:$0xff]
    %186 = vset.pattern.permute.xlu0 0
    %187 = vperm.xlu0 %186, %v181
    %v188 = vpop.permute.xlu0 %187
    %191 = vset.pattern.permute.xlu0 0
    %192 = vperm.xlu0 %191, %v182
    %v193 = vpop.permute.xlu0 %192
    %196 = vset.pattern.permute.xlu0 0
    %197 = vperm.xlu0 %196, %v183
    %v198 = vpop.permute.xlu0 %197
    %201 = vset.pattern.permute.xlu0 0
    %202 = vperm.xlu0 %201, %v184
    %v203 = vpop.permute.xlu0 %202
    %v209 = vunpack.c.l.b16 %v175
    %v210 = vunpack.c.l.b16 %v176
    %v211 = vunpack.c.l.b16 %v177
    %v212 = vunpack.c.l.b16 %v178
    %v213 = vpack.c.b16 %v210, %v209
    %v214 = vpack.c.b16 %v212, %v211
    %vm215 = vcmask 261120
    %v217 = vsel %vm215, %v213, 0
    %v220 = vsel %vm215, %v214, 0
    %222 = vmatprep.subr.bf16.mxu0 0
    %223 = vmatpush1.bf16.msra.mxu0 0
    %224 = vmatprep.subr.bf16.mxu0 0
    %225 = vmatpush1.bf16.msra.mxu0 0
    %226 = vmatprep.subr.bf16.mxu0 0
    %227 = vmatpush1.bf16.msra.mxu0 0
    %228 = vmatprep.subr.bf16.mxu0 0
    %229 = vmatpush1.bf16.msra.mxu0 0
    %230 = vmatprep.subr.bf16.mxu0 0
    %231 = vmatpush1.bf16.msra.mxu0 0
    %232 = vmatprep.subr.bf16.mxu0 0
    %233 = vmatpush1.bf16.msra.mxu0 0
    %234 = vmatprep.subr.bf16.mxu0 0
    %235 = vmatpush1.bf16.msra.mxu0 %v180
    %236 = vmatprep.subr.bf16.mxu0 0
    %237 = vmatpush1.bf16.msra.mxu0 %v179
    %238 = vmatprep.subr.bf16.mxu0 0
    %239 = vmatpush2.bf16.msra.mxu0 0
    %240 = vmatprep.subr.bf16.mxu0 0
    %241 = vmatpush2.bf16.msra.mxu0 0
    %242 = vmatprep.subr.bf16.mxu0 0
    %243 = vmatpush2.bf16.msra.mxu0 0
    %244 = vmatprep.subr.bf16.mxu0 0
    %245 = vmatpush2.bf16.msra.mxu0 0
    %246 = vmatprep.subr.bf16.mxu0 0
    %247 = vmatpush2.bf16.msra.mxu0 0
    %248 = vmatprep.subr.bf16.mxu0 0
    %249 = vmatpush2.bf16.msra.mxu0 0
    %250 = vmatprep.subr.bf16.mxu0 0
    %251 = vmatpush2.bf16.msra.mxu0 0
    %252 = vmatprep.subr.bf16.mxu0 0
    %253 = vmatpush2.bf16.msra.mxu0 0
    %254 = vmatprep.mubr.bf16.mxu0 0
    %255 = vmatmul.mubr.bf16.gmra.mxu0 %v217
    %v256 = vpop.f32.mrf.mxu0
    %v257 = vadd.f32 %v188, %v256
    %v258 = vpop.f32.mrf.mxu0
    %v259 = vpop.f32.mrf.mxu0
    %v260 = vadd.f32 %v193, %v259
    %v261 = vpop.f32.mrf.mxu0
    %262 = vmatprep.mubr.bf16.mxu0 0
    %263 = vmatmul.mubr.bf16.gmra.mxu0 %v220
    %v264 = vpop.f32.mrf.mxu0
    %v265 = vadd.f32 %v198, %v264
    %v266 = vpop.f32.mrf.mxu0
    %v267 = vpop.f32.mrf.mxu0
    %v268 = vadd.f32 %v203, %v267
    %v269 = vpop.f32.mrf.mxu0
    %270 = vdwg.mxu0
    %v271 = vmax.f32 %v257, 0.0
    %v272 = vmax.f32 %v260, 0.0
    %v273 = vmax.f32 %v265, 0.0
    %v274 = vmax.f32 %v268, 0.0
    %v275 = vld [vmem:[%s5] sm:$0xff]
    %v276 = vld [vmem:[%s5 + $0x8] sm:$0xff]
    %v277 = vld [vmem:[%s5 + $0x10] sm:$0xff]
    %v278 = vld [vmem:[%s5 + $0x18] sm:$0xff]
    %280 = vset.pattern.permute.xlu0 0
    %281 = vperm.xlu0 %280, %v275
    %v282 = vpop.permute.xlu0 %281
    %285 = vset.pattern.permute.xlu0 0
    %286 = vperm.xlu0 %285, %v276
    %v287 = vpop.permute.xlu0 %286
    %290 = vset.pattern.permute.xlu0 0
    %291 = vperm.xlu0 %290, %v277
    %v292 = vpop.permute.xlu0 %291
    %295 = vset.pattern.permute.xlu0 0
    %296 = vperm.xlu0 %295, %v278
    %v297 = vpop.permute.xlu0 %296
    %v299 = vmul.f32 %v271, %v282
    %v300 = vmul.f32 %v272, %v287
    %v301 = vmul.f32 %v273, %v292
    %v302 = vmul.f32 %v274, %v297
    %vm303 = vcmask 523264
    %v304 = vsel %vm303, %v299, 0.0
    %v305 = vsel %vm303, %v300, 0.0
    %v306 = vadd.f32 %v304, %v305
    %v307 = vsel %vm303, %v301, 0.0
    %v308 = vadd.f32 %v306, %v307
    %v309 = vsel %vm303, %v302, 0.0
    %v310 = vadd.f32 %v308, %v309
    %v311 = vrot.slane %v310, 4
    %v312 = vadd.f32 %v310, %v311
    %v313 = vrot.slane %v312, 2
    %v314 = vadd.f32 %v312, %v313
    %v315 = vrot.slane %v314, 1
    %v316 = vadd.f32 %v314, %v315
    %s317 = sld [smem:[#allocation2]]
    %v318 = vstv %s317
    %v319 = vadd.f32 %v316, %v318
    %vm320 = vcmask 516096
    %321 = vst.msk [vmem:[#allocation3] sm:$0x1] %vm320, %v319
    // Predicated region
    $region30: #{tpu_custom_call.1} parent=1 // pred_check
      _
    $region31: #{tpu_custom_call.1} parent=1 // pred_check_branch
      %323 = sbr.rel (0) target = $region33
    $region32: #{tpu_custom_call.1} parent=1 // pred_region
      %s325 = ssub.s32 16, 16
      %326 = vsyncadd [#allocation4], %s325
      %s328 = sshll.u32 [#allocation3], 4
      %s329 = int_to_ptr.vmem [resolvable:$true] %s328
      %331 = dma.vmem_to_hbm [thread:$0]  %s329, 16, %s7, [#allocation4]
    $region33: #{tpu_custom_call.1} parent=1 // pred_fallthru
      _
    // Predicated region
    $region34: #{tpu_custom_call.1} parent=1 // pred_check
      _
    $region35: #{tpu_custom_call.1} parent=1 // pred_check_branch
      %333 = sbr.rel (0) target = $region37
    $region36: #{tpu_custom_call.1} parent=1 // pred_region
      %334 = dma.done [#allocation4], 16
    $region37: #{tpu_custom_call.1} parent=1 // pred_fallthru
      _
    %335 = vsyncpa [#allocation4], 1

</llo_original>
